<compile_context>
chip_gen: v7x
topology: tpu7x:2x2x1
jax: 0.10.0
libtpu: 0.0.40
codegen_flags: <defaults>
</compile_context>

<pallas_src>
import jax
import jax.numpy as jnp
from jax.experimental import pallas as pl
from jax.experimental.pallas import tpu as pltpu

BN_EPS = 1e-5


def _round_up(x, m):
    return ((x + m - 1) // m) * m


# --------------------------------------------------------------------------------------
# Kernel
# --------------------------------------------------------------------------------------
def _graph_decoder_kernel(z_ref, w1_ref, b1_ref, w2_ref, b2_ref, out_ref):
    # fc1 (eval-mode BN already folded into w1/b1): bf16 operands on the MXU, f32 accumulate.
    h = jnp.dot(z_ref[...], w1_ref[...], preferred_element_type=jnp.float32)
    # bias-add + ReLU in f32 on the VPU (v5e has no bf16 VPU).
    h = jnp.maximum(h + b1_ref[...], 0.0)
    # Dropout: identity in eval mode.
    # fc2: cast the activation back to bf16 for the MXU, accumulate in f32.
    out = jnp.dot(h.astype(jnp.bfloat16), w2_ref[...], preferred_element_type=jnp.float32)
    out_ref[...] = out + b2_ref[...]


# --------------------------------------------------------------------------------------
# One-time parameter preparation (BN fold, padding, bf16 cast) — do this at load time.
# --------------------------------------------------------------------------------------
def prepare_params(raw, eps=BN_EPS):
    """Fold eval-mode BatchNorm into fc1, pad feature dims to lane width, cast weights bf16."""
    lat, hid = raw["w1"].shape
    out_ch = raw["w2"].shape[1]
    hid_p = _round_up(hid, 128)
    out_p = _round_up(out_ch, 128)

    inv_std = jax.lax.rsqrt(raw["run_var"].astype(jnp.float32) + eps)          # (1, H)
    scale = raw["gamma"] * inv_std                                             # (1, H)
    w1f = raw["w1"] * scale                                                    # (L, H)
    b1f = (raw["b1"] - raw["run_mean"]) * scale + raw["beta"]                  # (1, H)

    # Padded hid columns of w1/b1 are zero -> relu(0+0)=0 in h's padded columns, and
    # padded rows of w2 are zero, so padding is exact.  Weights bf16, biases f32.
    w1_p = jnp.zeros((lat, hid_p), jnp.bfloat16).at[:, :hid].set(w1f.astype(jnp.bfloat16))
    b1_p = jnp.zeros((1, hid_p), jnp.float32).at[:, :hid].set(b1f.astype(jnp.float32))
    w2_p = jnp.zeros((hid_p, out_p), jnp.bfloat16).at[:hid, :out_ch].set(
        raw["w2"].astype(jnp.bfloat16))
    b2_p = jnp.zeros((1, out_p), jnp.float32).at[:, :out_ch].set(raw["b2"].astype(jnp.float32))

    return dict(w1=w1_p, b1=b1_p, w2=w2_p, b2=b2_p,
                lat=lat, hid=hid, out_ch=out_ch, hid_p=hid_p, out_p=out_p)


# --------------------------------------------------------------------------------------
# pallas_call construction helpers
# --------------------------------------------------------------------------------------
def _resident_spec(shape, single_buffer):
    """BlockSpec for a weight/bias that stays VMEM-resident across all grid steps."""
    index_map = lambda i: (0,) * len(shape)
    if single_buffer:
        try:
            # Constant index_map -> never re-DMA'd; one pipeline buffer is enough.
            return pl.BlockSpec(shape, index_map, pipeline_mode=pl.Buffered(1))
        except Exception:
            pass
    return pl.BlockSpec(shape, index_map)


def _vmem_limit_bytes(tn, lat, hid_p, out_p, wbufs):
    """Explicit scoped-VMEM budget: weights*buffers + double-buffered z/out tiles + temps."""
    w = wbufs * (lat * hid_p * 2 + hid_p * out_p * 2 + hid_p * 4 + out_p * 4)
    z_tiles = 2 * tn * lat * 2            # double-buffered bf16 z tiles
    o_tiles = 2 * tn * out_p * 4          # double-buffered f32 out tiles
    tmp = tn * hid_p * 4 + tn * hid_p * 2 + tn * out_p * 4   # h(f32) + h(bf16) + acc
    est = w + z_tiles + o_tiles + tmp
    cap = 48 * 2 ** 20                    # safe on all of v5e/v6e/v7x
    try:
        cap = int(0.75 * pltpu.get_tpu_info().vmem_capacity_bytes)
    except Exception:
        pass
    return int(min(cap, max(2 * est, 16 * 2 ** 20)))


def _build_call(n, lat, hid_p, out_p, tn, single_buffer_weights):
    grid = (pl.cdiv(n, tn),)
    wbufs = 1 if single_buffer_weights else 2
    return pl.pallas_call(
        _graph_decoder_kernel,
        out_shape=jax.ShapeDtypeStruct((n, out_p), jnp.float32),
        grid_spec=pl.GridSpec(
            grid=grid,
            in_specs=[
                # z streamed per batch tile; full feature dim (== array dim, so lane rule ok).
                pl.BlockSpec((tn, lat), lambda i: (i, 0)),
                _resident_spec((lat, hid_p), single_buffer_weights),   # w1 (BN-folded, bf16)
                _resident_spec((1, hid_p), single_buffer_weights),     # b1 (BN-folded, f32)
                _resident_spec((hid_p, out_p), single_buffer_weights), # w2 (bf16)
                _resident_spec((1, out_p), single_buffer_weights),     # b2 (f32)
            ],
            out_specs=pl.BlockSpec((tn, out_p), lambda i: (i, 0)),     # lane-dense f32 store
        ),
        compiler_params=pltpu.CompilerParams(
            dimension_semantics=("parallel",),   # shard batch tiles across v7x's 2 TCs
            vmem_limit_bytes=_vmem_limit_bytes(tn, lat, hid_p, out_p, wbufs),
        ),
    )


# --------------------------------------------------------------------------------------
# Forward wrapper
# --------------------------------------------------------------------------------------
def graph_decoder_forward(z, prep, *, block_n=1024):
    """Fused GraphDecoder forward.  z: (N, lat_dim) -> (N, out_ch) f32 (eval-mode)."""
    n, lat = z.shape
    assert lat == prep["lat"], (lat, prep["lat"])
    hid_p, out_p, out_ch = prep["hid_p"], prep["out_p"], prep["out_ch"]

    # Only per-call activation work: cast to bf16 (no zero-padded copy of z is made).
    z_bf = z if z.dtype == jnp.bfloat16 else z.astype(jnp.bfloat16)

    # Batch tile: big (HBM-roofline), capped so large N gives >=2 grid steps (v7x 2 TCs);
    # candidates are multiples of 8 (and of 256 for large N — v6e MXU cadence).
    tn = min(block_n, _round_up(pl.cdiv(n, 2), 256), _round_up(n, 8))
    if tn >= n:
        tn = n   # single tile covering the full batch ("equal full dim" satisfies tiling rule)

    args = (z_bf, prep["w1"], prep["b1"], prep["w2"], prep["b2"])
    try:
        out_padded = _build_call(n, lat, hid_p, out_p, tn, True)(*args)
    except Exception:
        # Fallback if this JAX build rejects single-buffered resident operands.
        out_padded = _build_call(n, lat, hid_p, out_p, tn, False)(*args)

    # Lane-dense (n, out_p) store in the kernel; slice the padded columns off here.
    # (If out_ch << 128 and the consumer tolerates it, return out_padded instead.)
    return out_padded[:, :out_ch]


# --------------------------------------------------------------------------------------
# Synthetic parameters + plain-JAX reference
# --------------------------------------------------------------------------------------
def init_params(key, lat_dim, hid_ch, out_ch):
    """Deterministic synthetic parameters matching the module's shapes."""
    k1, k2, k3, k4, k5, k6 = jax.random.split(key, 6)
    # Linear weights stored as (in, out) == PyTorch weight.T
    w1 = jax.random.normal(k1, (lat_dim, hid_ch), jnp.float32) * (1.0 / jnp.sqrt(lat_dim))
    b1 = jax.random.normal(k2, (1, hid_ch), jnp.float32) * 0.01
    w2 = jax.random.normal(k3, (hid_ch, out_ch), jnp.float32) * (1.0 / jnp.sqrt(hid_ch))
    b2 = jax.random.normal(k4, (1, out_ch), jnp.float32) * 0.01
    gamma = 1.0 + 0.1 * jax.random.normal(k5, (1, hid_ch), jnp.float32)
    beta = 0.1 * jax.random.normal(k6, (1, hid_ch), jnp.float32)
    run_mean = 0.05 * jnp.arange(hid_ch, dtype=jnp.float32).reshape(1, hid_ch)
    run_var = 1.0 + 0.01 * jnp.arange(hid_ch, dtype=jnp.float32).reshape(1, hid_ch)
    return dict(w1=w1, b1=b1, w2=w2, b2=b2, gamma=gamma, beta=beta,
                run_mean=run_mean, run_var=run_var)


def reference_forward(z, p):
    """Plain-JAX f32 reference (eval-mode PyTorch semantics)."""
    h = z @ p["w1"] + p["b1"]
    h = (h - p["run_mean"]) / jnp.sqrt(p["run_var"] + BN_EPS) * p["gamma"] + p["beta"]
    h = jnp.maximum(h, 0.0)
    return h @ p["w2"] + p["b2"]


if __name__ == "__main__":
    key = jax.random.PRNGKey(0)
    kz, kp, kz2 = jax.random.split(key, 3)

    N, LAT, HID, OUT = 16, 32, 64, 16
    z = jax.random.normal(kz, (N, LAT), jnp.float32)
    raw = init_params(kp, LAT, HID, OUT)
    prep = prepare_params(raw)           # one-time: BN fold + padding + bf16 cast

    out = jax.block_until_ready(graph_decoder_forward(z, prep))
    ref = reference_forward(z, raw)
    assert out.shape == (N, OUT), out.shape
    # bf16 matmul operands -> ~1e-2 relative error vs the f32 reference; tolerances loosened.
    assert jnp.allclose(out, ref, atol=1e-1, rtol=1e-1), float(jnp.max(jnp.abs(out - ref)))

    # Secondary check: multi-tile batch grid with a ragged (partial) trailing tile, no padding.
    N2 = 300
    z2 = jax.random.normal(kz2, (N2, LAT), jnp.float32)
    out2 = jax.block_until_ready(graph_decoder_forward(z2, prep))
    ref2 = reference_forward(z2, raw)
    assert out2.shape == (N2, OUT), out2.shape
    assert jnp.allclose(out2, ref2, atol=1e-1, rtol=1e-1), float(jnp.max(jnp.abs(out2 - ref2)))

    print("KERNEL_OK")
</pallas_src>

<mosaic_0001>
module attributes {stable_mosaic.version = 11 : i64} {
  func.func @_graph_decoder_kernel(%arg0: i32, %arg1: memref<16x32xbf16, #tpu.memory_space<vmem>>, %arg2: memref<32x128xbf16, #tpu.memory_space<vmem>>, %arg3: memref<1x128xf32, #tpu.memory_space<vmem>>, %arg4: memref<128x128xbf16, #tpu.memory_space<vmem>>, %arg5: memref<1x128xf32, #tpu.memory_space<vmem>>, %arg6: memref<16x128xf32, #tpu.memory_space<vmem>>) attributes {dimension_semantics = [#tpu.dimension_semantics<parallel>], iteration_bounds = array<i64: 1>, scalar_prefetch = 0 : i64, scratch_operands = 0 : i64, tpu.core_type = #tpu.core_type<tc>, window_params = [{transform_indices = @transform_0, window_bounds = array<i64: 16, 32>}, {pipeline_mode = #tpu.pipeline_mode<synchronous>, transform_indices = @transform_1, window_bounds = array<i64: 32, 128>}, {pipeline_mode = #tpu.pipeline_mode<synchronous>, transform_indices = @transform_2, window_bounds = array<i64: 1, 128>}, {pipeline_mode = #tpu.pipeline_mode<synchronous>, transform_indices = @transform_3, window_bounds = array<i64: 128, 128>}, {pipeline_mode = #tpu.pipeline_mode<synchronous>, transform_indices = @transform_4, window_bounds = array<i64: 1, 128>}, {transform_indices = @transform_5, window_bounds = array<i64: 16, 128>}]} {
    %c0 = arith.constant 0 : index
    %c0_0 = arith.constant 0 : index
    %0 = vector.load %arg1[%c0, %c0_0] : memref<16x32xbf16, #tpu.memory_space<vmem>>, vector<16x32xbf16>
    %c0_1 = arith.constant 0 : index
    %c0_2 = arith.constant 0 : index
    %1 = vector.load %arg2[%c0_1, %c0_2] : memref<32x128xbf16, #tpu.memory_space<vmem>>, vector<32x128xbf16>
    %cst = arith.constant dense<0.000000e+00> : vector<16x128xf32>
    %2 = tpu.matmul %0, %1, %cst {dimension_numbers = #tpu.dot_dimension_numbers<[1], [0], [0], [1], [0, 0, 1, 1], [], []>} : vector<16x32xbf16>, vector<32x128xbf16>, vector<16x128xf32> -> vector<16x128xf32>
    %c0_3 = arith.constant 0 : index
    %c0_4 = arith.constant 0 : index
    %3 = vector.load %arg3[%c0_3, %c0_4] : memref<1x128xf32, #tpu.memory_space<vmem>>, vector<1x128xf32>
    %4 = vector.broadcast %3 : vector<1x128xf32> to vector<16x128xf32>
    %5 = arith.addf %2, %4 : vector<16x128xf32>
    %cst_5 = arith.constant 0.000000e+00 : f32
    %6 = vector.broadcast %cst_5 : f32 to vector<16x128xf32>
    %7 = arith.maximumf %5, %6 : vector<16x128xf32>
    %8 = arith.truncf %7 : vector<16x128xf32> to vector<16x128xbf16>
    %c0_6 = arith.constant 0 : index
    %c0_7 = arith.constant 0 : index
    %9 = vector.load %arg4[%c0_6, %c0_7] : memref<128x128xbf16, #tpu.memory_space<vmem>>, vector<128x128xbf16>
    %cst_8 = arith.constant dense<0.000000e+00> : vector<16x128xf32>
    %10 = tpu.matmul %8, %9, %cst_8 {dimension_numbers = #tpu.dot_dimension_numbers<[1], [0], [0], [1], [0, 0, 1, 1], [], []>} : vector<16x128xbf16>, vector<128x128xbf16>, vector<16x128xf32> -> vector<16x128xf32>
    %c0_9 = arith.constant 0 : index
    %c0_10 = arith.constant 0 : index
    %11 = vector.load %arg5[%c0_9, %c0_10] : memref<1x128xf32, #tpu.memory_space<vmem>>, vector<1x128xf32>
    %12 = vector.broadcast %11 : vector<1x128xf32> to vector<16x128xf32>
    %13 = arith.addf %10, %12 : vector<16x128xf32>
    %c0_11 = arith.constant 0 : index
    %c0_12 = arith.constant 0 : index
    %14 = vector.load %arg6[%c0_11, %c0_12] : memref<16x128xf32, #tpu.memory_space<vmem>>, vector<16x128xf32>
    tpu.vector_store %arg6[%c0_11, %c0_12], %13 {strides = array<i32>} : memref<16x128xf32, #tpu.memory_space<vmem>>, vector<16x128xf32>,
    return
  }
  func.func @transform_0(%arg0: i32) -> (i32, i32) {
    %c0_i32 = arith.constant 0 : i32
    %c0_i32_0 = arith.constant 0 : i32
    return %arg0, %c0_i32 : i32, i32
  }
  func.func @transform_1(%arg0: i32) -> (i32, i32) {
    %c0_i32 = arith.constant 0 : i32
    %c0_i32_0 = arith.constant 0 : i32
    %c0_i32_1 = arith.constant 0 : i32
    return %c0_i32, %c0_i32_0 : i32, i32
  }
  func.func @transform_2(%arg0: i32) -> (i32, i32) {
    %c0_i32 = arith.constant 0 : i32
    %c0_i32_0 = arith.constant 0 : i32
    %c0_i32_1 = arith.constant 0 : i32
    return %c0_i32, %c0_i32_0 : i32, i32
  }
  func.func @transform_3(%arg0: i32) -> (i32, i32) {
    %c0_i32 = arith.constant 0 : i32
    %c0_i32_0 = arith.constant 0 : i32
    %c0_i32_1 = arith.constant 0 : i32
    return %c0_i32, %c0_i32_0 : i32, i32
  }
  func.func @transform_4(%arg0: i32) -> (i32, i32) {
    %c0_i32 = arith.constant 0 : i32
    %c0_i32_0 = arith.constant 0 : i32
    %c0_i32_1 = arith.constant 0 : i32
    return %c0_i32, %c0_i32_0 : i32, i32
  }
  func.func @transform_5(%arg0: i32) -> (i32, i32) {
    %c0_i32 = arith.constant 0 : i32
    %c0_i32_0 = arith.constant 0 : i32
    return %arg0, %c0_i32 : i32, i32
  }
}

module attributes {stable_mosaic.version = 11 : i64} {
  func.func @_graph_decoder_kernel(%arg0: i32, %arg1: memref<16x32xbf16, #tpu.memory_space<vmem>>, %arg2: memref<32x128xbf16, #tpu.memory_space<vmem>>, %arg3: memref<1x128xf32, #tpu.memory_space<vmem>>, %arg4: memref<128x128xbf16, #tpu.memory_space<vmem>>, %arg5: memref<1x128xf32, #tpu.memory_space<vmem>>, %arg6: memref<16x128xf32, #tpu.memory_space<vmem>>) attributes {dimension_semantics = [#tpu.dimension_semantics<parallel>], iteration_bounds = array<i64: 1>, scalar_prefetch = 0 : i64, scratch_operands = 0 : i64, tpu.core_type = #tpu.core_type<tc>, window_params = [{transform_indices = @transform_0, window_bounds = array<i64: 16, 32>}, {pipeline_mode = #tpu.pipeline_mode<synchronous>, transform_indices = @transform_1, window_bounds = array<i64: 32, 128>}, {pipeline_mode = #tpu.pipeline_mode<synchronous>, transform_indices = @transform_2, window_bounds = array<i64: 1, 128>}, {pipeline_mode = #tpu.pipeline_mode<synchronous>, transform_indices = @transform_3, window_bounds = array<i64: 128, 128>}, {pipeline_mode = #tpu.pipeline_mode<synchronous>, transform_indices = @transform_4, window_bounds = array<i64: 1, 128>}, {transform_indices = @transform_5, window_bounds = array<i64: 16, 128>}]} {
    %c0 = arith.constant 0 : index
    %c0_0 = arith.constant 0 : index
    %0 = vector.load %arg1[%c0, %c0_0] : memref<16x32xbf16, #tpu.memory_space<vmem>>, vector<16x32xbf16>
    %c0_1 = arith.constant 0 : index
    %c0_2 = arith.constant 0 : index
    %1 = vector.load %arg2[%c0_1, %c0_2] : memref<32x128xbf16, #tpu.memory_space<vmem>>, vector<32x128xbf16>
    %cst = arith.constant dense<0.000000e+00> : vector<16x128xf32>
    %2 = tpu.matmul %0, %1, %cst {dimension_numbers = #tpu.dot_dimension_numbers<[1], [0], [0], [1], [0, 0, 1, 1], [], []>} : vector<16x32xbf16>, vector<32x128xbf16>, vector<16x128xf32> -> vector<16x128xf32>
    %c0_3 = arith.constant 0 : index
    %c0_4 = arith.constant 0 : index
    %3 = vector.load %arg3[%c0_3, %c0_4] : memref<1x128xf32, #tpu.memory_space<vmem>>, vector<1x128xf32>
    %4 = vector.broadcast %3 : vector<1x128xf32> to vector<16x128xf32>
    %5 = arith.addf %2, %4 : vector<16x128xf32>
    %cst_5 = arith.constant 0.000000e+00 : f32
    %6 = vector.broadcast %cst_5 : f32 to vector<16x128xf32>
    %7 = arith.maximumf %5, %6 : vector<16x128xf32>
    %8 = arith.truncf %7 : vector<16x128xf32> to vector<16x128xbf16>
    %c0_6 = arith.constant 0 : index
    %c0_7 = arith.constant 0 : index
    %9 = vector.load %arg4[%c0_6, %c0_7] : memref<128x128xbf16, #tpu.memory_space<vmem>>, vector<128x128xbf16>
    %cst_8 = arith.constant dense<0.000000e+00> : vector<16x128xf32>
    %10 = tpu.matmul %8, %9, %cst_8 {dimension_numbers = #tpu.dot_dimension_numbers<[1], [0], [0], [1], [0, 0, 1, 1], [], []>} : vector<16x128xbf16>, vector<128x128xbf16>, vector<16x128xf32> -> vector<16x128xf32>
    %c0_9 = arith.constant 0 : index
    %c0_10 = arith.constant 0 : index
    %11 = vector.load %arg5[%c0_9, %c0_10] : memref<1x128xf32, #tpu.memory_space<vmem>>, vector<1x128xf32>
    %12 = vector.broadcast %11 : vector<1x128xf32> to vector<16x128xf32>
    %13 = arith.addf %10, %12 : vector<16x128xf32>
    %c0_11 = arith.constant 0 : index
    %c0_12 = arith.constant 0 : index
    %14 = vector.load %arg6[%c0_11, %c0_12] : memref<16x128xf32, #tpu.memory_space<vmem>>, vector<16x128xf32>
    tpu.vector_store %arg6[%c0_11, %c0_12], %13 {strides = array<i32>} : memref<16x128xf32, #tpu.memory_space<vmem>>, vector<16x128xf32>,
    return
  }
  func.func @transform_0(%arg0: i32) -> (i32, i32) {
    %c0_i32 = arith.constant 0 : i32
    %c0_i32_0 = arith.constant 0 : i32
    return %arg0, %c0_i32 : i32, i32
  }
  func.func @transform_1(%arg0: i32) -> (i32, i32) {
    %c0_i32 = arith.constant 0 : i32
    %c0_i32_0 = arith.constant 0 : i32
    %c0_i32_1 = arith.constant 0 : i32
    return %c0_i32, %c0_i32_0 : i32, i32
  }
  func.func @transform_2(%arg0: i32) -> (i32, i32) {
    %c0_i32 = arith.constant 0 : i32
    %c0_i32_0 = arith.constant 0 : i32
    %c0_i32_1 = arith.constant 0 : i32
    return %c0_i32, %c0_i32_0 : i32, i32
  }
  func.func @transform_3(%arg0: i32) -> (i32, i32) {
    %c0_i32 = arith.constant 0 : i32
    %c0_i32_0 = arith.constant 0 : i32
    %c0_i32_1 = arith.constant 0 : i32
    return %c0_i32, %c0_i32_0 : i32, i32
  }
  func.func @transform_4(%arg0: i32) -> (i32, i32) {
    %c0_i32 = arith.constant 0 : i32
    %c0_i32_0 = arith.constant 0 : i32
    %c0_i32_1 = arith.constant 0 : i32
    return %c0_i32, %c0_i32_0 : i32, i32
  }
  func.func @transform_5(%arg0: i32) -> (i32, i32) {
    %c0_i32 = arith.constant 0 : i32
    %c0_i32_0 = arith.constant 0 : i32
    return %arg0, %c0_i32 : i32, i32
  }
}

</mosaic_0001>

<llo_original>
// kernel: tpu_custom_call.1
$region0: #{tpu_custom_call.1}
  #allocation0 [shape = 'u32[]', space=smem, size = 0x4, offset = 0x4, fixed_abs, tag = 'smem constant byte address 0x4 - core index']
  #allocation1 [shape = 'u32[144,128]{1,0:T(1,128)}', space=vmem, size = 0x12000, scoped, tag = 'internal scratch']
  %s0 = inlined_call_operand.hbm [shape: bf16[16,32], index: 0, kind: input, shape index: {}]
  %s1 = inlined_call_operand.hbm [shape: bf16[32,128], index: 1, kind: input, shape index: {}]
  %s2 = inlined_call_operand.vmem [shape: f32[1,128], index: 2, kind: input, shape index: {}]
  %s3 = inlined_call_operand.hbm [shape: bf16[128,128], index: 3, kind: input, shape index: {}]
  %s4 = inlined_call_operand.vmem [shape: f32[1,128], index: 4, kind: input, shape index: {}]
  %s5 = inlined_call_operand.hbm [shape: f32[16,128], index: 5, kind: output, shape index: {}]
  %s6 = sld [smem:[#allocation0]]
  $region42: #{tpu_custom_call.1} parent=0
    _
  %s8 = ssub.s32 1, %s6
  %s9 = scalar_select 0, %s8, %s6
  $region1: #{tpu_custom_call.1} parent=0
    #allocation2 [shape = 'u8[4096]{0}', space=vmem, size = 0x1000, scoped, tag = 'input window, operand 0, single buffered']
    #allocation3 [shape = 's32[1]{0}', space=sflag, size = 0x4, scoped, tag = 'scoped memory for tpu_custom_call.1']
    #allocation4 [shape = 's32[1]{0}', space=sflag, size = 0x4, scoped, tag = 'scoped memory for tpu_custom_call.1']
    #allocation5 [shape = 'u8[8192]{0}', space=vmem, size = 0x2000, scoped, tag = 'input window, operand 1, single buffered']
    #allocation6 [shape = 's32[1]{0}', space=sflag, size = 0x4, scoped, tag = 'scoped memory for tpu_custom_call.1']
    #allocation7 [shape = 'u8[32768]{0}', space=vmem, size = 0x8000, scoped, tag = 'input window, operand 3, single buffered']
    #allocation8 [shape = 'u8[8192]{0}', space=vmem, size = 0x2000, scoped, tag = 'output window, operand 0, single buffered']
    %10 = vsyncpa [#allocation3], 0
    %11 = vsyncpa [#allocation6], 0
    %12 = vsyncpa [#allocation4], 0
    // Predicated region
    $region2: #{tpu_custom_call.1} parent=1 // pred_check
      _
    $region3: #{tpu_custom_call.1} parent=1 // pred_check_branch
      %14 = sbr.rel (0) target = $region5
    $region4: #{tpu_custom_call.1} parent=1 // pred_region
      %s16 = ssub.s32 128, 128
      %17 = vsyncadd [#allocation3], %s16
      %s18 = sshll.u32 [#allocation2], 4
      %s19 = int_to_ptr.vmem [resolvable:$true] %s18
      %24 = dma.hbm_to_vmem [thread:$0]  %s0, 128, %s19, [#allocation3], 64, 64, 4
    $region5: #{tpu_custom_call.1} parent=1 // pred_fallthru
      _
    // Predicated region
    $region6: #{tpu_custom_call.1} parent=1 // pred_check
      _
    $region7: #{tpu_custom_call.1} parent=1 // pred_check_branch
      %26 = sbr.rel (0) target = $region9
    $region8: #{tpu_custom_call.1} parent=1 // pred_region
      %s28 = ssub.s32 256, 256
      %29 = vsyncadd [#allocation6], %s28
      %s30 = sshll.u32 [#allocation5], 4
      %s31 = int_to_ptr.vmem [resolvable:$true] %s30
      %36 = dma.hbm_to_vmem [thread:$0]  %s1, 256, %s31, [#allocation6], 64, 64, 4
    $region9: #{tpu_custom_call.1} parent=1 // pred_fallthru
      _
    // Predicated region
    $region10: #{tpu_custom_call.1} parent=1 // pred_check
      _
    $region11: #{tpu_custom_call.1} parent=1 // pred_check_branch
      %38 = sbr.rel (0) target = $region13
    $region12: #{tpu_custom_call.1} parent=1 // pred_region
      _
    $region13: #{tpu_custom_call.1} parent=1 // pred_fallthru
      _
    // Predicated region
    $region14: #{tpu_custom_call.1} parent=1 // pred_check
      _
    $region15: #{tpu_custom_call.1} parent=1 // pred_check_branch
      %40 = sbr.rel (0) target = $region17
    $region16: #{tpu_custom_call.1} parent=1 // pred_region
      %s42 = ssub.s32 1024, 1024
      %43 = vsyncadd [#allocation6], %s42
      %s44 = sshll.u32 [#allocation7], 4
      %s45 = int_to_ptr.vmem [resolvable:$true] %s44
      %50 = dma.hbm_to_vmem [thread:$0]  %s3, 1024, %s45, [#allocation6], 64, 64, 4
    $region17: #{tpu_custom_call.1} parent=1 // pred_fallthru
      _
    // Predicated region
    $region18: #{tpu_custom_call.1} parent=1 // pred_check
      _
    $region19: #{tpu_custom_call.1} parent=1 // pred_check_branch
      %52 = sbr.rel (0) target = $region21
    $region20: #{tpu_custom_call.1} parent=1 // pred_region
      _
    $region21: #{tpu_custom_call.1} parent=1 // pred_fallthru
      _
    // Predicated region
    $region22: #{tpu_custom_call.1} parent=1 // pred_check
      _
    $region23: #{tpu_custom_call.1} parent=1 // pred_check_branch
      %54 = sbr.rel (0) target = $region25
    $region24: #{tpu_custom_call.1} parent=1 // pred_region
      %55 = dma.done [#allocation3], 128
    $region25: #{tpu_custom_call.1} parent=1 // pred_fallthru
      _
    // Predicated region
    $region26: #{tpu_custom_call.1} parent=1 // pred_check
      _
    $region27: #{tpu_custom_call.1} parent=1 // pred_check_branch
      %57 = sbr.rel (0) target = $region29
    $region28: #{tpu_custom_call.1} parent=1 // pred_region
      %58 = dma.done [#allocation6], 256
    $region29: #{tpu_custom_call.1} parent=1 // pred_fallthru
      _
    // Predicated region
    $region30: #{tpu_custom_call.1} parent=1 // pred_check
      _
    $region31: #{tpu_custom_call.1} parent=1 // pred_check_branch
      %60 = sbr.rel (0) target = $region33
    $region32: #{tpu_custom_call.1} parent=1 // pred_region
      %61 = dma.done [#allocation6], 1024
    $region33: #{tpu_custom_call.1} parent=1 // pred_fallthru
      _
    %v63 = vld [vmem:[#allocation2] sm:$0xf]
    %v64 = vld [vmem:[#allocation2 + $0x4] sm:$0xf]
    %v65 = vld [vmem:[#allocation5] sm:$0xf]
    %v66 = vld [vmem:[#allocation5 + $0x4] sm:$0xf]
    %v67 = vld [vmem:[#allocation5 + $0x8] sm:$0xf]
    %v68 = vld [vmem:[#allocation5 + $0xc] sm:$0xf]
    %v69 = vld [vmem:[%s2] sm:$0x1]
    %v71 = vlaneseq
    %v72 = vshrl.u32 %v71, 7
    %v73 = vsub.s32 0, %v72
    %v74 = vrot.slane %v69, %v73
    %v78 = vunpack.c.l.b16 %v63
    %v79 = vunpack.c.l.b16 %v64
    %v80 = vpack.c.b16 %v79, %v78
    %v85 = vunpack.c.l.b16 %v65
    %v86 = vunpack.c.l.b16 %v66
    %v87 = vunpack.c.l.b16 %v67
    %v88 = vunpack.c.l.b16 %v68
    %v89 = vpack.c.b16 %v86, %v85
    %v90 = vpack.c.b16 %v88, %v87
    %vm93 = vcmask 261120
    %v95 = vsel %vm93, %v80, 0
    %97 = vmatprep.subr.bf16.mxu0 0
    %98 = vmatpush1.bf16.msra.mxu0 %v89
    %99 = vmatprep.subr.bf16.mxu0 0
    %100 = vmatpush1.bf16.msra.mxu0 %v90
    %101 = vmatprep.subr.bf16.mxu0 0
    %102 = vmatpush1.bf16.msra.mxu0 0
    %103 = vmatprep.subr.bf16.mxu0 0
    %104 = vmatpush1.bf16.msra.mxu0 0
    %105 = vmatprep.subr.bf16.mxu0 0
    %106 = vmatpush1.bf16.msra.mxu0 0
    %107 = vmatprep.subr.bf16.mxu0 0
    %108 = vmatpush1.bf16.msra.mxu0 0
    %109 = vmatprep.subr.bf16.mxu0 0
    %110 = vmatpush1.bf16.msra.mxu0 0
    %111 = vmatprep.subr.bf16.mxu0 0
    %112 = vmatpush1.bf16.msra.mxu0 0
    %113 = vmatprep.subr.bf16.mxu0 0
    %114 = vmatpush1.bf16.msra.mxu0 0
    %115 = vmatprep.subr.bf16.mxu0 0
    %116 = vmatpush1.bf16.msra.mxu0 0
    %117 = vmatprep.subr.bf16.mxu0 0
    %118 = vmatpush1.bf16.msra.mxu0 0
    %119 = vmatprep.subr.bf16.mxu0 0
    %120 = vmatpush1.bf16.msra.mxu0 0
    %121 = vmatprep.subr.bf16.mxu0 0
    %122 = vmatpush1.bf16.msra.mxu0 0
    %123 = vmatprep.subr.bf16.mxu0 0
    %124 = vmatpush1.bf16.msra.mxu0 0
    %125 = vmatprep.subr.bf16.mxu0 0
    %126 = vmatpush1.bf16.msra.mxu0 0
    %127 = vmatprep.subr.bf16.mxu0 0
    %128 = vmatpush1.bf16.msra.mxu0 0
    %129 = vmatprep.mubr.bf16.mxu0 0
    %130 = vmatmul.mubr.bf16.gmra.mrb[0].mxu0 %v95
    %v131 = vpop.f32.mrb[0].mxu0
    %v132 = vadd.f32 %v74, %v131
    %v133 = vpop.f32.mrb[0].mxu0
    %v134 = vpop.f32.mrb[0].mxu0
    %v135 = vadd.f32 %v74, %v134
    %v136 = vpop.f32.mrb[0].mxu0
    %137 = vdwg.mxu0
    %v138 = vmax.f32 %v132, 0.0
    %v139 = vmax.f32 %v135, 0.0
    %v140 = vpack.c.bf16 %v139, %v138
    %v141 = vld [vmem:[#allocation7] sm:$0xf]
    %v142 = vld [vmem:[#allocation7 + $0x4] sm:$0xf]
    %v143 = vld [vmem:[#allocation7 + $0x8] sm:$0xf]
    %v144 = vld [vmem:[#allocation7 + $0xc] sm:$0xf]
    %v145 = vld [vmem:[#allocation7 + $0x10] sm:$0xf]
    %v146 = vld [vmem:[#allocation7 + $0x14] sm:$0xf]
    %v147 = vld [vmem:[#allocation7 + $0x18] sm:$0xf]
    %v148 = vld [vmem:[#allocation7 + $0x1c] sm:$0xf]
    %v149 = vld [vmem:[#allocation7 + $0x20] sm:$0xf]
    %v150 = vld [vmem:[#allocation7 + $0x24] sm:$0xf]
    %v151 = vld [vmem:[#allocation7 + $0x28] sm:$0xf]
    %v152 = vld [vmem:[#allocation7 + $0x2c] sm:$0xf]
    %v153 = vld [vmem:[#allocation7 + $0x30] sm:$0xf]
    %v154 = vld [vmem:[#allocation7 + $0x34] sm:$0xf]
    %v155 = vld [vmem:[#allocation7 + $0x38] sm:$0xf]
    %v156 = vld [vmem:[#allocation7 + $0x3c] sm:$0xf]
    %v157 = vld [vmem:[%s4] sm:$0x1]
    %v159 = vlaneseq
    %v160 = vshrl.u32 %v159, 7
    %v161 = vsub.s32 0, %v160
    %v162 = vrot.slane %v157, %v161
    %v180 = vunpack.c.l.b16 %v141
    %v181 = vunpack.c.l.b16 %v142
    %v182 = vunpack.c.l.b16 %v143
    %v183 = vunpack.c.l.b16 %v144
    %v184 = vunpack.c.l.b16 %v145
    %v185 = vunpack.c.l.b16 %v146
    %v186 = vunpack.c.l.b16 %v147
    %v187 = vunpack.c.l.b16 %v148
    %v188 = vunpack.c.l.b16 %v149
    %v189 = vunpack.c.l.b16 %v150
    %v190 = vunpack.c.l.b16 %v151
    %v191 = vunpack.c.l.b16 %v152
    %v192 = vunpack.c.l.b16 %v153
    %v193 = vunpack.c.l.b16 %v154
    %v194 = vunpack.c.l.b16 %v155
    %v195 = vunpack.c.l.b16 %v156
    %v196 = vpack.c.b16 %v181, %v180
    %v197 = vpack.c.b16 %v183, %v182
    %v198 = vpack.c.b16 %v185, %v184
    %v199 = vpack.c.b16 %v187, %v186
    %v200 = vpack.c.b16 %v189, %v188
    %v201 = vpack.c.b16 %v191, %v190
    %v202 = vpack.c.b16 %v193, %v192
    %v203 = vpack.c.b16 %v195, %v194
    %212 = vmatprep.subr.bf16.mxu0 0
    %213 = vmatpush1.bf16.msra.mxu0 %v196
    %214 = vmatprep.subr.bf16.mxu0 0
    %215 = vmatpush1.bf16.msra.mxu0 %v197
    %216 = vmatprep.subr.bf16.mxu0 0
    %217 = vmatpush1.bf16.msra.mxu0 %v198
    %218 = vmatprep.subr.bf16.mxu0 0
    %219 = vmatpush1.bf16.msra.mxu0 %v199
    %220 = vmatprep.subr.bf16.mxu0 0
    %221 = vmatpush1.bf16.msra.mxu0 %v200
    %222 = vmatprep.subr.bf16.mxu0 0
    %223 = vmatpush1.bf16.msra.mxu0 %v201
    %224 = vmatprep.subr.bf16.mxu0 0
    %225 = vmatpush1.bf16.msra.mxu0 %v202
    %226 = vmatprep.subr.bf16.mxu0 0
    %227 = vmatpush1.bf16.msra.mxu0 %v203
    %228 = vmatprep.subr.bf16.mxu0 0
    %229 = vmatpush1.bf16.msra.mxu0 0
    %230 = vmatprep.subr.bf16.mxu0 0
    %231 = vmatpush1.bf16.msra.mxu0 0
    %232 = vmatprep.subr.bf16.mxu0 0
    %233 = vmatpush1.bf16.msra.mxu0 0
    %234 = vmatprep.subr.bf16.mxu0 0
    %235 = vmatpush1.bf16.msra.mxu0 0
    %236 = vmatprep.subr.bf16.mxu0 0
    %237 = vmatpush1.bf16.msra.mxu0 0
    %238 = vmatprep.subr.bf16.mxu0 0
    %239 = vmatpush1.bf16.msra.mxu0 0
    %240 = vmatprep.subr.bf16.mxu0 0
    %241 = vmatpush1.bf16.msra.mxu0 0
    %242 = vmatprep.subr.bf16.mxu0 0
    %243 = vmatpush1.bf16.msra.mxu0 0
    %244 = vmatprep.mubr.bf16.mxu0 0
    %245 = vmatmul.mubr.bf16.gmra.mrb[0].mxu0 %v140
    %v246 = vpop.f32.mrb[0].mxu0
    %v247 = vadd.f32 %v162, %v246
    %v248 = vpop.f32.mrb[0].mxu0
    %v249 = vpop.f32.mrb[0].mxu0
    %v250 = vadd.f32 %v162, %v249
    %v251 = vpop.f32.mrb[0].mxu0
    %252 = vdwg.mxu0
    %253 = vst [vmem:[#allocation8] sm:$0xff] %v247
    %254 = vst [vmem:[#allocation8 + $0x8] sm:$0xff] %v250
    // Predicated region
    $region34: #{tpu_custom_call.1} parent=1 // pred_check
      _
    $region35: #{tpu_custom_call.1} parent=1 // pred_check_branch
      %256 = sbr.rel (0) target = $region37
    $region36: #{tpu_custom_call.1} parent=1 // pred_region
      %s258 = ssub.s32 256, 256
      %259 = vsyncadd [#allocation4], %s258
      %s260 = sshll.u32 [#allocation8], 4
      %s261 = int_to_ptr.vmem [resolvable:$true] %s260
      %266 = dma.vmem_to_hbm [thread:$0]  %s261, 256, %s5, [#allocation4], 128, 128, 8
    $region37: #{tpu_custom_call.1} parent=1 // pred_fallthru
      _
    // Predicated region
    $region38: #{tpu_custom_call.1} parent=1 // pred_check
      _
    $region39: #{tpu_custom_call.1} parent=1 // pred_check_branch
      %268 = sbr.rel (0) target = $region41
    $region40: #{tpu_custom_call.1} parent=1 // pred_region
      %269 = dma.done [#allocation4], 256
    $region41: #{tpu_custom_call.1} parent=1 // pred_fallthru
      _
    %270 = vsyncpa [#allocation3], 1
    %271 = vsyncpa [#allocation6], 1
    %272 = vsyncpa [#allocation4], 1

// kernel: tpu_custom_call.1
$region0: #{tpu_custom_call.1}
  #allocation0 [shape = 'u32[]', space=smem, size = 0x4, offset = 0x4, fixed_abs, tag = 'smem constant byte address 0x4 - core index']
  #allocation1 [shape = 'u32[144,128]{1,0:T(1,128)}', space=vmem, size = 0x12000, scoped, tag = 'internal scratch']
  %s0 = inlined_call_operand.hbm [shape: bf16[16,32], index: 0, kind: input, shape index: {}]
  %s1 = inlined_call_operand.hbm [shape: bf16[32,128], index: 1, kind: input, shape index: {}]
  %s2 = inlined_call_operand.vmem [shape: f32[1,128], index: 2, kind: input, shape index: {}]
  %s3 = inlined_call_operand.hbm [shape: bf16[128,128], index: 3, kind: input, shape index: {}]
  %s4 = inlined_call_operand.vmem [shape: f32[1,128], index: 4, kind: input, shape index: {}]
  %s5 = inlined_call_operand.hbm [shape: f32[16,128], index: 5, kind: output, shape index: {}]
  %s6 = sld [smem:[#allocation0]]
  $region42: #{tpu_custom_call.1} parent=0
    _
  %s8 = ssub.s32 1, %s6
  %s9 = scalar_select 0, %s8, %s6
  $region1: #{tpu_custom_call.1} parent=0
    #allocation2 [shape = 'u8[4096]{0}', space=vmem, size = 0x1000, scoped, tag = 'input window, operand 0, single buffered']
    #allocation3 [shape = 's32[1]{0}', space=sflag, size = 0x4, scoped, tag = 'scoped memory for tpu_custom_call.1']
    #allocation4 [shape = 's32[1]{0}', space=sflag, size = 0x4, scoped, tag = 'scoped memory for tpu_custom_call.1']
    #allocation5 [shape = 'u8[8192]{0}', space=vmem, size = 0x2000, scoped, tag = 'input window, operand 1, single buffered']
    #allocation6 [shape = 's32[1]{0}', space=sflag, size = 0x4, scoped, tag = 'scoped memory for tpu_custom_call.1']
    #allocation7 [shape = 'u8[32768]{0}', space=vmem, size = 0x8000, scoped, tag = 'input window, operand 3, single buffered']
    #allocation8 [shape = 'u8[8192]{0}', space=vmem, size = 0x2000, scoped, tag = 'output window, operand 0, single buffered']
    %10 = vsyncpa [#allocation3], 0
    %11 = vsyncpa [#allocation6], 0
    %12 = vsyncpa [#allocation4], 0
    // Predicated region
    $region2: #{tpu_custom_call.1} parent=1 // pred_check
      _
    $region3: #{tpu_custom_call.1} parent=1 // pred_check_branch
      %14 = sbr.rel (0) target = $region5
    $region4: #{tpu_custom_call.1} parent=1 // pred_region
      %s16 = ssub.s32 128, 128
      %17 = vsyncadd [#allocation3], %s16
      %s18 = sshll.u32 [#allocation2], 4
      %s19 = int_to_ptr.vmem [resolvable:$true] %s18
      %24 = dma.hbm_to_vmem [thread:$0]  %s0, 128, %s19, [#allocation3], 64, 64, 4
    $region5: #{tpu_custom_call.1} parent=1 // pred_fallthru
      _
    // Predicated region
    $region6: #{tpu_custom_call.1} parent=1 // pred_check
      _
    $region7: #{tpu_custom_call.1} parent=1 // pred_check_branch
      %26 = sbr.rel (0) target = $region9
    $region8: #{tpu_custom_call.1} parent=1 // pred_region
      %s28 = ssub.s32 256, 256
      %29 = vsyncadd [#allocation6], %s28
      %s30 = sshll.u32 [#allocation5], 4
      %s31 = int_to_ptr.vmem [resolvable:$true] %s30
      %36 = dma.hbm_to_vmem [thread:$0]  %s1, 256, %s31, [#allocation6], 64, 64, 4
    $region9: #{tpu_custom_call.1} parent=1 // pred_fallthru
      _
    // Predicated region
    $region10: #{tpu_custom_call.1} parent=1 // pred_check
      _
    $region11: #{tpu_custom_call.1} parent=1 // pred_check_branch
      %38 = sbr.rel (0) target = $region13
    $region12: #{tpu_custom_call.1} parent=1 // pred_region
      _
    $region13: #{tpu_custom_call.1} parent=1 // pred_fallthru
      _
    // Predicated region
    $region14: #{tpu_custom_call.1} parent=1 // pred_check
      _
    $region15: #{tpu_custom_call.1} parent=1 // pred_check_branch
      %40 = sbr.rel (0) target = $region17
    $region16: #{tpu_custom_call.1} parent=1 // pred_region
      %s42 = ssub.s32 1024, 1024
      %43 = vsyncadd [#allocation6], %s42
      %s44 = sshll.u32 [#allocation7], 4
      %s45 = int_to_ptr.vmem [resolvable:$true] %s44
      %50 = dma.hbm_to_vmem [thread:$0]  %s3, 1024, %s45, [#allocation6], 64, 64, 4
    $region17: #{tpu_custom_call.1} parent=1 // pred_fallthru
      _
    // Predicated region
    $region18: #{tpu_custom_call.1} parent=1 // pred_check
      _
    $region19: #{tpu_custom_call.1} parent=1 // pred_check_branch
      %52 = sbr.rel (0) target = $region21
    $region20: #{tpu_custom_call.1} parent=1 // pred_region
      _
    $region21: #{tpu_custom_call.1} parent=1 // pred_fallthru
      _
    // Predicated region
    $region22: #{tpu_custom_call.1} parent=1 // pred_check
      _
    $region23: #{tpu_custom_call.1} parent=1 // pred_check_branch
      %54 = sbr.rel (0) target = $region25
    $region24: #{tpu_custom_call.1} parent=1 // pred_region
      %55 = dma.done [#allocation3], 128
    $region25: #{tpu_custom_call.1} parent=1 // pred_fallthru
      _
    // Predicated region
    $region26: #{tpu_custom_call.1} parent=1 // pred_check
      _
    $region27: #{tpu_custom_call.1} parent=1 // pred_check_branch
      %57 = sbr.rel (0) target = $region29
    $region28: #{tpu_custom_call.1} parent=1 // pred_region
      %58 = dma.done [#allocation6], 256
    $region29: #{tpu_custom_call.1} parent=1 // pred_fallthru
      _
    // Predicated region
    $region30: #{tpu_custom_call.1} parent=1 // pred_check
      _
    $region31: #{tpu_custom_call.1} parent=1 // pred_check_branch
      %60 = sbr.rel (0) target = $region33
    $region32: #{tpu_custom_call.1} parent=1 // pred_region
      %61 = dma.done [#allocation6], 1024
    $region33: #{tpu_custom_call.1} parent=1 // pred_fallthru
      _
    %v63 = vld [vmem:[#allocation2] sm:$0xf]
    %v64 = vld [vmem:[#allocation2 + $0x4] sm:$0xf]
    %v65 = vld [vmem:[#allocation5] sm:$0xf]
    %v66 = vld [vmem:[#allocation5 + $0x4] sm:$0xf]
    %v67 = vld [vmem:[#allocation5 + $0x8] sm:$0xf]
    %v68 = vld [vmem:[#allocation5 + $0xc] sm:$0xf]
    %v69 = vld [vmem:[%s2] sm:$0x1]
    %v71 = vlaneseq
    %v72 = vshrl.u32 %v71, 7
    %v73 = vsub.s32 0, %v72
    %v74 = vrot.slane %v69, %v73
    %v78 = vunpack.c.l.b16 %v63
    %v79 = vunpack.c.l.b16 %v64
    %v80 = vpack.c.b16 %v79, %v78
    %v85 = vunpack.c.l.b16 %v65
    %v86 = vunpack.c.l.b16 %v66
    %v87 = vunpack.c.l.b16 %v67
    %v88 = vunpack.c.l.b16 %v68
    %v89 = vpack.c.b16 %v86, %v85
    %v90 = vpack.c.b16 %v88, %v87
    %vm93 = vcmask 261120
    %v95 = vsel %vm93, %v80, 0
    %97 = vmatprep.subr.bf16.mxu0 0
    %98 = vmatpush1.bf16.msra.mxu0 %v89
    %99 = vmatprep.subr.bf16.mxu0 0
    %100 = vmatpush1.bf16.msra.mxu0 %v90
    %101 = vmatprep.subr.bf16.mxu0 0
    %102 = vmatpush1.bf16.msra.mxu0 0
    %103 = vmatprep.subr.bf16.mxu0 0
    %104 = vmatpush1.bf16.msra.mxu0 0
    %105 = vmatprep.subr.bf16.mxu0 0
    %106 = vmatpush1.bf16.msra.mxu0 0
    %107 = vmatprep.subr.bf16.mxu0 0
    %108 = vmatpush1.bf16.msra.mxu0 0
    %109 = vmatprep.subr.bf16.mxu0 0
    %110 = vmatpush1.bf16.msra.mxu0 0
    %111 = vmatprep.subr.bf16.mxu0 0
    %112 = vmatpush1.bf16.msra.mxu0 0
    %113 = vmatprep.subr.bf16.mxu0 0
    %114 = vmatpush1.bf16.msra.mxu0 0
    %115 = vmatprep.subr.bf16.mxu0 0
    %116 = vmatpush1.bf16.msra.mxu0 0
    %117 = vmatprep.subr.bf16.mxu0 0
    %118 = vmatpush1.bf16.msra.mxu0 0
    %119 = vmatprep.subr.bf16.mxu0 0
    %120 = vmatpush1.bf16.msra.mxu0 0
    %121 = vmatprep.subr.bf16.mxu0 0
    %122 = vmatpush1.bf16.msra.mxu0 0
    %123 = vmatprep.subr.bf16.mxu0 0
    %124 = vmatpush1.bf16.msra.mxu0 0
    %125 = vmatprep.subr.bf16.mxu0 0
    %126 = vmatpush1.bf16.msra.mxu0 0
    %127 = vmatprep.subr.bf16.mxu0 0
    %128 = vmatpush1.bf16.msra.mxu0 0
    %129 = vmatprep.mubr.bf16.mxu0 0
    %130 = vmatmul.mubr.bf16.gmra.mrb[0].mxu0 %v95
    %v131 = vpop.f32.mrb[0].mxu0
    %v132 = vadd.f32 %v74, %v131
    %v133 = vpop.f32.mrb[0].mxu0
    %v134 = vpop.f32.mrb[0].mxu0
    %v135 = vadd.f32 %v74, %v134
    %v136 = vpop.f32.mrb[0].mxu0
    %137 = vdwg.mxu0
    %v138 = vmax.f32 %v132, 0.0
    %v139 = vmax.f32 %v135, 0.0
    %v140 = vpack.c.bf16 %v139, %v138
    %v141 = vld [vmem:[#allocation7] sm:$0xf]
    %v142 = vld [vmem:[#allocation7 + $0x4] sm:$0xf]
    %v143 = vld [vmem:[#allocation7 + $0x8] sm:$0xf]
    %v144 = vld [vmem:[#allocation7 + $0xc] sm:$0xf]
    %v145 = vld [vmem:[#allocation7 + $0x10] sm:$0xf]
    %v146 = vld [vmem:[#allocation7 + $0x14] sm:$0xf]
    %v147 = vld [vmem:[#allocation7 + $0x18] sm:$0xf]
    %v148 = vld [vmem:[#allocation7 + $0x1c] sm:$0xf]
    %v149 = vld [vmem:[#allocation7 + $0x20] sm:$0xf]
    %v150 = vld [vmem:[#allocation7 + $0x24] sm:$0xf]
    %v151 = vld [vmem:[#allocation7 + $0x28] sm:$0xf]
    %v152 = vld [vmem:[#allocation7 + $0x2c] sm:$0xf]
    %v153 = vld [vmem:[#allocation7 + $0x30] sm:$0xf]
    %v154 = vld [vmem:[#allocation7 + $0x34] sm:$0xf]
    %v155 = vld [vmem:[#allocation7 + $0x38] sm:$0xf]
    %v156 = vld [vmem:[#allocation7 + $0x3c] sm:$0xf]
    %v157 = vld [vmem:[%s4] sm:$0x1]
    %v159 = vlaneseq
    %v160 = vshrl.u32 %v159, 7
    %v161 = vsub.s32 0, %v160
    %v162 = vrot.slane %v157, %v161
    %v180 = vunpack.c.l.b16 %v141
    %v181 = vunpack.c.l.b16 %v142
    %v182 = vunpack.c.l.b16 %v143
    %v183 = vunpack.c.l.b16 %v144
    %v184 = vunpack.c.l.b16 %v145
    %v185 = vunpack.c.l.b16 %v146
    %v186 = vunpack.c.l.b16 %v147
    %v187 = vunpack.c.l.b16 %v148
    %v188 = vunpack.c.l.b16 %v149
    %v189 = vunpack.c.l.b16 %v150
    %v190 = vunpack.c.l.b16 %v151
    %v191 = vunpack.c.l.b16 %v152
    %v192 = vunpack.c.l.b16 %v153
    %v193 = vunpack.c.l.b16 %v154
    %v194 = vunpack.c.l.b16 %v155
    %v195 = vunpack.c.l.b16 %v156
    %v196 = vpack.c.b16 %v181, %v180
    %v197 = vpack.c.b16 %v183, %v182
    %v198 = vpack.c.b16 %v185, %v184
    %v199 = vpack.c.b16 %v187, %v186
    %v200 = vpack.c.b16 %v189, %v188
    %v201 = vpack.c.b16 %v191, %v190
    %v202 = vpack.c.b16 %v193, %v192
    %v203 = vpack.c.b16 %v195, %v194
    %212 = vmatprep.subr.bf16.mxu0 0
    %213 = vmatpush1.bf16.msra.mxu0 %v196
    %214 = vmatprep.subr.bf16.mxu0 0
    %215 = vmatpush1.bf16.msra.mxu0 %v197
    %216 = vmatprep.subr.bf16.mxu0 0
    %217 = vmatpush1.bf16.msra.mxu0 %v198
    %218 = vmatprep.subr.bf16.mxu0 0
    %219 = vmatpush1.bf16.msra.mxu0 %v199
    %220 = vmatprep.subr.bf16.mxu0 0
    %221 = vmatpush1.bf16.msra.mxu0 %v200
    %222 = vmatprep.subr.bf16.mxu0 0
    %223 = vmatpush1.bf16.msra.mxu0 %v201
    %224 = vmatprep.subr.bf16.mxu0 0
    %225 = vmatpush1.bf16.msra.mxu0 %v202
    %226 = vmatprep.subr.bf16.mxu0 0
    %227 = vmatpush1.bf16.msra.mxu0 %v203
    %228 = vmatprep.subr.bf16.mxu0 0
    %229 = vmatpush1.bf16.msra.mxu0 0
    %230 = vmatprep.subr.bf16.mxu0 0
    %231 = vmatpush1.bf16.msra.mxu0 0
    %232 = vmatprep.subr.bf16.mxu0 0
    %233 = vmatpush1.bf16.msra.mxu0 0
    %234 = vmatprep.subr.bf16.mxu0 0
    %235 = vmatpush1.bf16.msra.mxu0 0
    %236 = vmatprep.subr.bf16.mxu0 0
    %237 = vmatpush1.bf16.msra.mxu0 0
    %238 = vmatprep.subr.bf16.mxu0 0
    %239 = vmatpush1.bf16.msra.mxu0 0
    %240 = vmatprep.subr.bf16.mxu0 0
    %241 = vmatpush1.bf16.msra.mxu0 0
    %242 = vmatprep.subr.bf16.mxu0 0
    %243 = vmatpush1.bf16.msra.mxu0 0
    %244 = vmatprep.mubr.bf16.mxu0 0
    %245 = vmatmul.mubr.bf16.gmra.mrb[0].mxu0 %v140
    %v246 = vpop.f32.mrb[0].mxu0
    %v247 = vadd.f32 %v162, %v246
    %v248 = vpop.f32.mrb[0].mxu0
    %v249 = vpop.f32.mrb[0].mxu0
    %v250 = vadd.f32 %v162, %v249
    %v251 = vpop.f32.mrb[0].mxu0
    %252 = vdwg.mxu0
    %253 = vst [vmem:[#allocation8] sm:$0xff] %v247
    %254 = vst [vmem:[#allocation8 + $0x8] sm:$0xff] %v250
    // Predicated region
    $region34: #{tpu_custom_call.1} parent=1 // pred_check
      _
    $region35: #{tpu_custom_call.1} parent=1 // pred_check_branch
      %256 = sbr.rel (0) target = $region37
    $region36: #{tpu_custom_call.1} parent=1 // pred_region
      %s258 = ssub.s32 256, 256
      %259 = vsyncadd [#allocation4], %s258
      %s260 = sshll.u32 [#allocation8], 4
      %s261 = int_to_ptr.vmem [resolvable:$true] %s260
      %266 = dma.vmem_to_hbm [thread:$0]  %s261, 256, %s5, [#allocation4], 128, 128, 8
    $region37: #{tpu_custom_call.1} parent=1 // pred_fallthru
      _
    // Predicated region
    $region38: #{tpu_custom_call.1} parent=1 // pred_check
      _
    $region39: #{tpu_custom_call.1} parent=1 // pred_check_branch
      %268 = sbr.rel (0) target = $region41
    $region40: #{tpu_custom_call.1} parent=1 // pred_region
      %269 = dma.done [#allocation4], 256
    $region41: #{tpu_custom_call.1} parent=1 // pred_fallthru
      _
    %270 = vsyncpa [#allocation3], 1
    %271 = vsyncpa [#allocation6], 1
    %272 = vsyncpa [#allocation4], 1

</llo_original>
